<compile_context>
chip_gen: v6e
topology: v6e:2x2x1
jax: 0.10.0
libtpu: 0.0.40
codegen_flags: <defaults>
</compile_context>

<pallas_src>
import functools

import jax
import jax.numpy as jnp
from jax import lax
from jax.experimental import pallas as pl
from jax.experimental.pallas import tpu as pltpu


def _normalize_indices(idx, v_dim):
    """Match nn.Embedding index semantics: allow negative (pad) indices."""
    idx = idx.astype(jnp.int32)
    idx = jnp.where(idx < 0, idx + v_dim, idx)
    return jnp.clip(idx, 0, v_dim - 1)


@functools.partial(jax.jit, static_argnames=("tile_b",))
def skipgram_loss_pallas(center_idx, pos_idx, neg_idx, center_w, context_w,
                         tile_b=8):
    (B,) = center_idx.shape
    _, P = pos_idx.shape
    _, N = neg_idx.shape
    V, D = center_w.shape
    n_ctx = P + N
    TB = int(min(tile_b, B))
    R = TB * n_ctx
    n_tiles = pl.cdiv(B, TB)

    ctr_idx = _normalize_indices(center_idx, V)                        # (B,)
    ctx_idx = _normalize_indices(
        jnp.concatenate([pos_idx, neg_idx], axis=1), V).reshape(-1)    # (B*(P+N),)

    def kernel(ctr_idx_ref, ctx_idx_ref, ctr_tbl_ref, ctx_tbl_ref,
               o_ref, ctr_g, ctx_g):
        pid = pl.program_id(0)
        base = pid * TB                                 # first batch row of tile

        @pl.when(pid == 0)
        def _init():
            o_ref[...] = jnp.zeros_like(o_ref)

        # ---- fused gather: table rows -> sublane-dense (R, D) scratch slabs ----
        def gather_batch_row(b_local, carry):
            g_b = jnp.minimum(base + b_local, B - 1)    # clamp ragged tail
            c_idx = ctr_idx_ref[g_b]                    # scalar from SMEM
            c_row = ctr_tbl_ref[pl.ds(c_idx, 1), :]     # (1, D)
            row0 = b_local * n_ctx

            def gather_ctx(j, carry2):
                r = row0 + j
                x_idx = ctx_idx_ref[g_b * n_ctx + j]
                sgn = jnp.where(j < P, jnp.float32(1.0), jnp.float32(-1.0))
                ctx_g[pl.ds(r, 1), :] = ctx_tbl_ref[pl.ds(x_idx, 1), :] * sgn
                ctr_g[pl.ds(r, 1), :] = c_row
                return carry2

            return lax.fori_loop(0, n_ctx, gather_ctx, carry)

        lax.fori_loop(0, TB, gather_batch_row, 0)

        # ---- VPU mul + XLU lane reduce + EUP logsigmoid (no MXU) ----
        prod = ctr_g[...] * ctx_g[...]                          # (R, D)
        logits = jnp.sum(prod, axis=-1, keepdims=True)          # (R, 1)
        # stable logsigmoid: min(x,0) - log1p(exp(-|x|))
        log_sig = jnp.minimum(logits, 0.0) - jnp.log1p(jnp.exp(-jnp.abs(logits)))

        # mask rows of the ragged last tile
        r_iota = lax.broadcasted_iota(jnp.int32, (R, 1), 0)
        n_valid = jnp.minimum(jnp.maximum(B - base, 0), TB) * n_ctx
        valid = (r_iota < n_valid).astype(jnp.float32)

        o_ref[...] += jnp.sum(log_sig * valid)

        @pl.when(pid == pl.num_programs(0) - 1)
        def _finalize():
            o_ref[...] = o_ref[...] * jnp.float32(-1.0 / B)

    out = pl.pallas_call(
        kernel,
        out_shape=jax.ShapeDtypeStruct((1, 1), jnp.float32),
        grid_spec=pltpu.PrefetchScalarGridSpec(
            num_scalar_prefetch=2,                 # ctr_idx, ctx_idx -> SMEM
            grid=(n_tiles,),
            in_specs=[
                pl.BlockSpec((V, D), lambda i, *_: (0, 0)),   # center table
                pl.BlockSpec((V, D), lambda i, *_: (0, 0)),   # context table
            ],
            out_specs=pl.BlockSpec((1, 1), lambda i, *_: (0, 0)),
            scratch_shapes=[
                pltpu.VMEM((R, D), jnp.float32),   # center rows, repeated per ctx
                pltpu.VMEM((R, D), jnp.float32),   # signed context rows
            ],
        ),
        compiler_params=pltpu.CompilerParams(
            dimension_semantics=("arbitrary",),    # output accumulator axis
            vmem_limit_bytes=32 * 1024 * 1024,
        ),
    )(ctr_idx, ctx_idx, center_w, context_w)
    return out[0, 0]


class SkipGramPallas:
    """JAX/Pallas port of the PyTorch SkipGram module (forward pass only)."""

    def __init__(self, v_dim, d_dim, pad_index, key):
        if pad_index < 0:
            pad_index = v_dim + pad_index
        self.v_dim = v_dim
        self.d_dim = d_dim
        self.pad_index = pad_index
        k1, k2 = jax.random.split(key)
        # nn.Embedding default init ~ N(0, 1); padding row forced to zero.
        center_w = jax.random.normal(k1, (v_dim, d_dim), jnp.float32)
        context_w = jax.random.normal(k2, (v_dim, d_dim), jnp.float32)
        self.center_w = center_w.at[pad_index].set(0.0)
        self.context_w = context_w.at[pad_index].set(0.0)

    def forward(self, data_in, tile_b=8):
        center_idx, pos_idx, neg_idx = data_in
        return skipgram_loss_pallas(center_idx, pos_idx, neg_idx,
                                    self.center_w, self.context_w,
                                    tile_b=tile_b)


def _reference_loss(center, pos_c, neg_c):
    """Pure-JAX reference mirroring the PyTorch forward."""
    cb = center[:, :, None]                                       # (B, D, 1)
    pos_logits = jnp.squeeze(jnp.matmul(pos_c, cb), axis=-1)       # (B, P)
    neg_logits = jnp.squeeze(jnp.matmul(-neg_c, cb), axis=-1)      # (B, N)
    logsig = lambda x: jnp.minimum(x, 0.0) - jnp.log1p(jnp.exp(-jnp.abs(x)))
    pos_scores = jnp.sum(logsig(pos_logits), axis=1)
    neg_scores = jnp.sum(logsig(neg_logits), axis=1)
    return -jnp.sum(pos_scores + neg_scores) / pos_logits.shape[0]


if __name__ == "__main__":
    key = jax.random.PRNGKey(0)
    k_model, k_center, k_pos, k_neg = jax.random.split(key, 4)

    V, D = 64, 32          # vocabulary size, embedding dim
    B, P, N = 19, 5, 5     # batch (ragged vs TB=8), positive contexts, negatives
    PAD = -1               # pad index, as in the module's default

    model = SkipGramPallas(V, D, PAD, k_model)
    pad_pos = model.pad_index

    center_idx = jax.random.randint(k_center, (B,), 0, V - 1)
    pos_idx = jax.random.randint(k_pos, (B, P), 0, V - 1)
    # Inject some padded context slots (they embed to zeros).
    pos_idx = pos_idx.at[:, -1].set(pad_pos)
    neg_idx = jax.random.randint(k_neg, (B, N), 0, V - 1)

    loss = model.forward((center_idx, pos_idx, neg_idx), tile_b=8)
    loss = jax.block_until_ready(loss)

    # Sanity check against a pure-JAX reference.
    center = jnp.take(model.center_w, center_idx, axis=0)
    pos_c = jnp.take(model.context_w, pos_idx, axis=0)
    neg_c = jnp.take(model.context_w, neg_idx, axis=0)
    ref = _reference_loss(center, pos_c, neg_c)
    assert jnp.allclose(loss, ref, rtol=1e-5, atol=1e-4), (loss, ref)

    print("KERNEL_OK")
</pallas_src>

<mosaic_0001>
module attributes {stable_mosaic.version = 11 : i64} {
  func.func @kernel(%arg0: i32, %arg1: memref<19xi32, #tpu.memory_space<smem>>, %arg2: memref<190xi32, #tpu.memory_space<smem>>, %arg3: memref<64x32xf32, #tpu.memory_space<vmem>>, %arg4: memref<64x32xf32, #tpu.memory_space<vmem>>, %arg5: memref<1x1xf32, #tpu.memory_space<vmem>>, %arg6: memref<80x32xf32, #tpu.memory_space<vmem>>, %arg7: memref<80x32xf32, #tpu.memory_space<vmem>>) attributes {dimension_semantics = [#tpu.dimension_semantics<arbitrary>], iteration_bounds = array<i64: 3>, scalar_prefetch = 2 : i64, scratch_operands = 2 : i64, tpu.core_type = #tpu.core_type<tc>, window_params = [{pipeline_mode = #tpu.pipeline_mode<synchronous>, transform_indices = @transform_0, window_bounds = array<i64: 64, 32>}, {pipeline_mode = #tpu.pipeline_mode<synchronous>, transform_indices = @transform_1, window_bounds = array<i64: 64, 32>}, {pipeline_mode = #tpu.pipeline_mode<synchronous>, transform_indices = @transform_2, window_bounds = array<i64: 1, 1>}]} {
    %c8_i32 = arith.constant 8 : i32
    %0 = arith.muli %arg0, %c8_i32 : i32
    %c0_i32 = arith.constant 0 : i32
    %1 = arith.cmpi eq, %arg0, %c0_i32 : i32
    %2 = arith.extui %1 : i1 to i32
    %c0_i32_0 = arith.constant 0 : i32
    %3 = arith.cmpi ne, %2, %c0_i32_0 : i32
    scf.if %3 {
      %cst_17 = arith.constant 0.000000e+00 : f32
      %39 = vector.broadcast %cst_17 : f32 to vector<1x1xf32>
      %c0_18 = arith.constant 0 : index
      %c0_19 = arith.constant 0 : index
      %40 = vector.load %arg5[%c0_18, %c0_19] : memref<1x1xf32, #tpu.memory_space<vmem>>, vector<1x1xf32>
      tpu.vector_store %arg5[%c0_18, %c0_19], %39 {strides = array<i32>} : memref<1x1xf32, #tpu.memory_space<vmem>>, vector<1x1xf32>,
    } else {
    }
    %c0_i32_1 = arith.constant 0 : i32
    %c8_i32_2 = arith.constant 8 : i32
    %4 = arith.addi %c0_i32_1, %c8_i32_2 : i32
    %c1_i32 = arith.constant 1 : i32
    scf.for %arg8 = %c0_i32_1 to %4 step %c1_i32  : i32 {
      %39 = arith.addi %0, %arg8 : i32
      %c18_i32 = arith.constant 18 : i32
      %40 = arith.minsi %39, %c18_i32 : i32
      %41 = arith.index_cast %40 : i32 to index
      %42 = memref.load %arg1[%41] : memref<19xi32, #tpu.memory_space<smem>>
      %43 = arith.index_cast %42 : i32 to index
      %c0_17 = arith.constant 0 : index
      %44 = vector.load %arg3[%43, %c0_17] : memref<64x32xf32, #tpu.memory_space<vmem>>, vector<1x32xf32>
      %c10_i32_18 = arith.constant 10 : i32
      %45 = arith.muli %arg8, %c10_i32_18 : i32
      %c0_i32_19 = arith.constant 0 : i32
      %c10_i32_20 = arith.constant 10 : i32
      %46 = arith.addi %c0_i32_19, %c10_i32_20 : i32
      %c1_i32_21 = arith.constant 1 : i32
      scf.for %arg9 = %c0_i32_19 to %46 step %c1_i32_21  : i32 {
        %47 = arith.addi %45, %arg9 : i32
        %c10_i32_23 = arith.constant 10 : i32
        %48 = arith.muli %40, %c10_i32_23 : i32
        %49 = arith.addi %48, %arg9 : i32
        %50 = arith.index_cast %49 : i32 to index
        %51 = memref.load %arg2[%50] : memref<190xi32, #tpu.memory_space<smem>>
        %c5_i32 = arith.constant 5 : i32
        %52 = arith.cmpi slt, %arg9, %c5_i32 : i32
        %cst_24 = arith.constant 1.000000e+00 : f32
        %cst_25 = arith.constant -1.000000e+00 : f32
        %53 = arith.select %52, %cst_24, %cst_25 : f32
        %54 = arith.index_cast %51 : i32 to index
        %c0_26 = arith.constant 0 : index
        %55 = vector.load %arg4[%54, %c0_26] : memref<64x32xf32, #tpu.memory_space<vmem>>, vector<1x32xf32>
        %56 = vector.broadcast %53 : f32 to vector<1x32xf32>
        %57 = arith.mulf %55, %56 : vector<1x32xf32>
        %58 = arith.index_cast %47 : i32 to index
        %c0_27 = arith.constant 0 : index
        %59 = vector.load %arg7[%58, %c0_27] : memref<80x32xf32, #tpu.memory_space<vmem>>, vector<1x32xf32>
        tpu.vector_store %arg7[%58, %c0_27], %57 {strides = array<i32>} : memref<80x32xf32, #tpu.memory_space<vmem>>, vector<1x32xf32>,
        %60 = arith.index_cast %47 : i32 to index
        %c0_28 = arith.constant 0 : index
        %61 = vector.load %arg6[%60, %c0_28] : memref<80x32xf32, #tpu.memory_space<vmem>>, vector<1x32xf32>
        tpu.vector_store %arg6[%60, %c0_28], %44 {strides = array<i32>} : memref<80x32xf32, #tpu.memory_space<vmem>>, vector<1x32xf32>,
      }
      %c10_i32_22 = arith.constant 10 : i32
    }
    %c8_i32_3 = arith.constant 8 : i32
    %c0 = arith.constant 0 : index
    %c0_4 = arith.constant 0 : index
    %5 = vector.load %arg6[%c0, %c0_4] : memref<80x32xf32, #tpu.memory_space<vmem>>, vector<80x32xf32>
    %c0_5 = arith.constant 0 : index
    %c0_6 = arith.constant 0 : index
    %6 = vector.load %arg7[%c0_5, %c0_6] : memref<80x32xf32, #tpu.memory_space<vmem>>, vector<80x32xf32>
    %7 = arith.mulf %5, %6 : vector<80x32xf32>
    %cst = arith.constant dense<0.000000e+00> : vector<80xf32>
    %8 = vector.multi_reduction <add>, %7, %cst [1] : vector<80x32xf32> to vector<80xf32>
    %9 = vector.shape_cast %8 : vector<80xf32> to vector<80x1xf32>
    %cst_7 = arith.constant 0.000000e+00 : f32
    %10 = vector.broadcast %cst_7 : f32 to vector<80x1xf32>
    %11 = arith.minimumf %9, %10 : vector<80x1xf32>
    %12 = math.absf %9 : vector<80x1xf32>
    %cst_8 = arith.constant 0.000000e+00 : f32
    %13 = vector.broadcast %cst_8 : f32 to vector<80x1xf32>
    %14 = arith.subf %13, %12 : vector<80x1xf32>
    %15 = math.exp %14 : vector<80x1xf32>
    %16 = math.log1p %15 : vector<80x1xf32>
    %17 = arith.subf %11, %16 : vector<80x1xf32>
    %18 = tpu.iota {dimensions = array<i32: 0>} : vector<80x1xi32>
    %c19_i32 = arith.constant 19 : i32
    %19 = arith.subi %c19_i32, %0 : i32
    %c0_i32_9 = arith.constant 0 : i32
    %20 = arith.maxsi %19, %c0_i32_9 : i32
    %c8_i32_10 = arith.constant 8 : i32
    %21 = arith.minsi %20, %c8_i32_10 : i32
    %c10_i32 = arith.constant 10 : i32
    %22 = arith.muli %21, %c10_i32 : i32
    %23 = vector.broadcast %22 : i32 to vector<80x1xi32>
    %24 = arith.cmpi slt, %18, %23 : vector<80x1xi32>
    %25 = arith.extui %24 : vector<80x1xi1> to vector<80x1xi32>
    %26 = arith.sitofp %25 : vector<80x1xi32> to vector<80x1xf32>
    %c0_11 = arith.constant 0 : index
    %c0_12 = arith.constant 0 : index
    %27 = vector.load %arg5[%c0_11, %c0_12] : memref<1x1xf32, #tpu.memory_space<vmem>>, vector<1x1xf32>
    %28 = arith.mulf %17, %26 : vector<80x1xf32>
    %29 = vector.shape_cast %28 : vector<80x1xf32> to vector<1x80x1xf32>
    %cst_13 = arith.constant dense<0.000000e+00> : vector<1xf32>
    %30 = vector.multi_reduction <add>, %29, %cst_13 [1, 2] : vector<1x80x1xf32> to vector<1xf32>
    %31 = vector.shape_cast %30 : vector<1xf32> to vector<1x1x1xf32>
    %32 = vector.extract %31[0, 0, 0] : f32 from vector<1x1x1xf32>
    %33 = vector.broadcast %32 : f32 to vector<1x1xf32>
    %34 = arith.addf %27, %33 : vector<1x1xf32>
    %c0_14 = arith.constant 0 : index
    %c0_15 = arith.constant 0 : index
    %35 = vector.load %arg5[%c0_14, %c0_15] : memref<1x1xf32, #tpu.memory_space<vmem>>, vector<1x1xf32>
    tpu.vector_store %arg5[%c0_14, %c0_15], %34 {strides = array<i32>} : memref<1x1xf32, #tpu.memory_space<vmem>>, vector<1x1xf32>,
    %c2_i32 = arith.constant 2 : i32
    %36 = arith.cmpi eq, %arg0, %c2_i32 : i32
    %37 = arith.extui %36 : i1 to i32
    %c0_i32_16 = arith.constant 0 : i32
    %38 = arith.cmpi ne, %37, %c0_i32_16 : i32
    scf.if %38 {
      %c0_17 = arith.constant 0 : index
      %c0_18 = arith.constant 0 : index
      %39 = vector.load %arg5[%c0_17, %c0_18] : memref<1x1xf32, #tpu.memory_space<vmem>>, vector<1x1xf32>
      %cst_19 = arith.constant -0.0526315793 : f32
      %40 = vector.broadcast %cst_19 : f32 to vector<1x1xf32>
      %41 = arith.mulf %39, %40 : vector<1x1xf32>
      %c0_20 = arith.constant 0 : index
      %c0_21 = arith.constant 0 : index
      %42 = vector.load %arg5[%c0_20, %c0_21] : memref<1x1xf32, #tpu.memory_space<vmem>>, vector<1x1xf32>
      tpu.vector_store %arg5[%c0_20, %c0_21], %41 {strides = array<i32>} : memref<1x1xf32, #tpu.memory_space<vmem>>, vector<1x1xf32>,
    } else {
    }
    return
  }
  func.func @transform_0(%arg0: i32, %arg1: memref<19xi32, #tpu.memory_space<smem>>, %arg2: memref<190xi32, #tpu.memory_space<smem>>) -> (i32, i32) {
    %c0_i32 = arith.constant 0 : i32
    %c0_i32_0 = arith.constant 0 : i32
    %c0_i32_1 = arith.constant 0 : i32
    return %c0_i32, %c0_i32_0 : i32, i32
  }
  func.func @transform_1(%arg0: i32, %arg1: memref<19xi32, #tpu.memory_space<smem>>, %arg2: memref<190xi32, #tpu.memory_space<smem>>) -> (i32, i32) {
    %c0_i32 = arith.constant 0 : i32
    %c0_i32_0 = arith.constant 0 : i32
    %c0_i32_1 = arith.constant 0 : i32
    return %c0_i32, %c0_i32_0 : i32, i32
  }
  func.func @transform_2(%arg0: i32, %arg1: memref<19xi32, #tpu.memory_space<smem>>, %arg2: memref<190xi32, #tpu.memory_space<smem>>) -> (i32, i32) {
    %c0_i32 = arith.constant 0 : i32
    %c0_i32_0 = arith.constant 0 : i32
    %c0_i32_1 = arith.constant 0 : i32
    return %c0_i32, %c0_i32_0 : i32, i32
  }
}

</mosaic_0001>

<llo_original>
// kernel: skipgram_loss_pallas.1
$region0: #{skipgram_loss_pallas.1}
  #allocation0 [shape = 'u32[]', space=smem, size = 0x4, offset = 0x4, fixed_abs, tag = 'smem constant byte address 0x4 - core index']
  #allocation1 [shape = 'u32[144,128]{1,0:T(1,128)}', space=vmem, size = 0x12000, scoped, tag = 'internal scratch']
  #allocation2 [shape = 'f32[80,32]{1,0:T(8,128)}', space=vmem, size = 0xa000, scoped, tag = 'scratch operand']
  #allocation3 [shape = 'f32[80,32]{1,0:T(8,128)}', space=vmem, size = 0xa000, scoped, tag = 'scratch operand']
  #allocation4 [shape = 's32[1]{0}', space=sflag, size = 0x4, scoped, tag = 'scoped memory for skipgram_loss_pallas.1']
  #allocation5 [shape = 'u8[512]{0}', space=smem, size = 0x200, scoped, tag = 'prefetched SMEM operand 0']
  #allocation6 [shape = 'u8[1024]{0}', space=smem, size = 0x400, scoped, tag = 'prefetched SMEM operand 1']
  %s0 = inlined_call_operand.vmem [shape: s32[19], index: 0, kind: input, shape index: {}]
  %s1 = inlined_call_operand.vmem [shape: s32[190], index: 1, kind: input, shape index: {}]
  %s2 = inlined_call_operand.vmem [shape: f32[64,32], index: 2, kind: input, shape index: {}]
  %s3 = inlined_call_operand.vmem [shape: f32[64,32], index: 3, kind: input, shape index: {}]
  %s4 = inlined_call_operand.hbm [shape: f32[1,1], index: 4, kind: output, shape index: {}]
  %s5 = sld [smem:[#allocation0]]
  $region63: #{skipgram_loss_pallas.1} parent=0
    _
  %s7 = ssub.s32 1, %s5
  %s8 = scalar_select 0, %s7, %s5
  %s9 = sshll.u32 %s0, 4
  %s10 = int_to_ptr.vmem [resolvable:$true] %s9
  %12 = dma.vmem_to_smem %s10, 16, [#allocation5], [#allocation4]
  %s13 = sshll.u32 %s1, 4
  %s14 = int_to_ptr.vmem [resolvable:$true] %s13
  %16 = dma.vmem_to_smem %s14, 32, [#allocation6], [#allocation4]
  %17 = dma.done [#allocation4], 48
  %18 = sfence
  $region1: #{skipgram_loss_pallas.1} parent=0
    #allocation7 [shape = 'u8[512]{0}', space=vmem, size = 0x400, scoped, tag = 'output window, operand 0, single buffered']
    #allocation8 [shape = 's32[2]{0}', space=sflag, size = 0x8, scoped, tag = 'scoped memory for skipgram_loss_pallas.1']
    %19 = vsyncpa [#allocation8], 0
    loop: start=0, step=1, limit=5
    $region2: #{skipgram_loss_pallas.1} parent=1 // loop_pre_header
      _
    $region3: #{skipgram_loss_pallas.1} parent=1 // loop_header
      %s21 = sphi 0, %s25
      %p22 = scmp.ge.s32.totalorder %s21, 5
      %s29 = sphi 0, %s29
      %s31 = sphi 0, %s29
      %s32 = sphi 0, %s31
      %s46 = sphi 0, %s32
      %s50 = sphi 0, %s50
      %s52 = sphi 0, %s50
      %s53 = sphi 0, %s52
      %s67 = sphi 0, %s53
      %s71 = sphi 0, %s71
      %s73 = sphi 0, %s71
      %s74 = sphi 0, %s73
      %s88 = sphi 0, %s74
    $region4: #{skipgram_loss_pallas.1} parent=1 // loop_header_branch
      %24 = sbr.rel (%p22) target = $region8
    $region5: #{skipgram_loss_pallas.1} parent=1 // loop_body
      %s26 = ssub.s32 %s21, 1
      %s27 = ssub.s32 %s21, 2
      %s28 = sadd.s32 %s21, 1
      %s30 = sadd.s32 %s29, 1
      %p33 = scmp.eq.s32.totalorder %s21, 2
      %p34 = scmp.ne.s32.totalorder %s29, %s31
      %p35 = scmp.eq.s32.totalorder %s21, 0
      %p36 = por %p34, %p35
      %p37 = scmp.ne.s32.totalorder %s29, %s31
      %p38 = scmp.eq.s32.totalorder %s26, 2
      %p39 = por %p37, %p38
      %p40 = scmp.ne.s32.totalorder %s31, %s32
      %p41 = scmp.eq.s32.totalorder %s26, 0
      %p42 = por %p40, %p41
      %p43 = scmp.ne.s32.totalorder %s31, %s32
      %p44 = scmp.eq.s32.totalorder %s27, 2
      %p45 = por %p43, %p44
      %p47 = scmp.ne.s32.totalorder %s32, %s46
      %p48 = scmp.eq.s32.totalorder %s27, 0
      %p49 = por %p47, %p48
      %s51 = sadd.s32 %s50, 1
      %p54 = scmp.eq.s32.totalorder %s21, 2
      %p55 = scmp.ne.s32.totalorder %s50, %s52
      %p56 = scmp.eq.s32.totalorder %s21, 0
      %p57 = por %p55, %p56
      %p58 = scmp.ne.s32.totalorder %s50, %s52
      %p59 = scmp.eq.s32.totalorder %s26, 2
      %p60 = por %p58, %p59
      %p61 = scmp.ne.s32.totalorder %s52, %s53
      %p62 = scmp.eq.s32.totalorder %s26, 0
      %p63 = por %p61, %p62
      %p64 = scmp.ne.s32.totalorder %s52, %s53
      %p65 = scmp.eq.s32.totalorder %s27, 2
      %p66 = por %p64, %p65
      %p68 = scmp.ne.s32.totalorder %s53, %s67
      %p69 = scmp.eq.s32.totalorder %s27, 0
      %p70 = por %p68, %p69
      %s72 = sadd.s32 %s71, 1
      %p75 = scmp.eq.s32.totalorder %s21, 2
      %p76 = scmp.ne.s32.totalorder %s71, %s73
      %p77 = scmp.eq.s32.totalorder %s21, 0
      %p78 = por %p76, %p77
      %p79 = scmp.ne.s32.totalorder %s71, %s73
      %p80 = scmp.eq.s32.totalorder %s26, 2
      %p81 = por %p79, %p80
      %p82 = scmp.ne.s32.totalorder %s73, %s74
      %p83 = scmp.eq.s32.totalorder %s26, 0
      %p84 = por %p82, %p83
      %p85 = scmp.ne.s32.totalorder %s73, %s74
      %p86 = scmp.eq.s32.totalorder %s27, 2
      %p87 = por %p85, %p86
      %p89 = scmp.ne.s32.totalorder %s74, %s88
      %p90 = scmp.eq.s32.totalorder %s27, 0
      %p91 = por %p89, %p90
      %p92 = scmp.le.s32.totalorder 1, %s21
      %p93 = scmp.lt.s32.totalorder %s21, 4
      %p94 = pnand %p92, %p93
      %p95 = pneg %p94
      // Predicated region
      $region9: #{skipgram_loss_pallas.1} parent=5 // pred_check
        _
      $region10: #{skipgram_loss_pallas.1} parent=5 // pred_check_branch
        %97 = sbr.rel (%p94) target = $region12
      $region11: #{skipgram_loss_pallas.1} parent=5 // pred_region
        %s98 = ssub.s32 %s21, 1
        // Predicated region
        $region13: #{skipgram_loss_pallas.1} parent=11 // pred_check
          %p99 = pneg %p42
        $region14: #{skipgram_loss_pallas.1} parent=11 // pred_check_branch
          %101 = sbr.rel (%p99) target = $region16
        $region15: #{skipgram_loss_pallas.1} parent=11 // pred_region
          _
        $region16: #{skipgram_loss_pallas.1} parent=11 // pred_fallthru
          _
        // Predicated region
        $region17: #{skipgram_loss_pallas.1} parent=11 // pred_check
          %p102 = pneg %p63
        $region18: #{skipgram_loss_pallas.1} parent=11 // pred_check_branch
          %104 = sbr.rel (%p102) target = $region20
        $region19: #{skipgram_loss_pallas.1} parent=11 // pred_region
          _
        $region20: #{skipgram_loss_pallas.1} parent=11 // pred_fallthru
          _
      $region12: #{skipgram_loss_pallas.1} parent=5 // pred_fallthru
        _
      %p105 = scmp.lt.s32.totalorder %s21, 3
      // Predicated region
      $region21: #{skipgram_loss_pallas.1} parent=5 // pred_check
        %p106 = pneg %p105
      $region22: #{skipgram_loss_pallas.1} parent=5 // pred_check_branch
        %108 = sbr.rel (%p106) target = $region24
      $region23: #{skipgram_loss_pallas.1} parent=5 // pred_region
        _
      $region24: #{skipgram_loss_pallas.1} parent=5 // pred_fallthru
        _
      %p109 = scmp.le.s32.totalorder 1, %s21
      %p110 = scmp.lt.s32.totalorder %s21, 4
      %p111 = pnand %p109, %p110
      %p112 = pneg %p111
      // Predicated region
      $region25: #{skipgram_loss_pallas.1} parent=5 // pred_check
        _
      $region26: #{skipgram_loss_pallas.1} parent=5 // pred_check_branch
        %114 = sbr.rel (%p111) target = $region28
      $region27: #{skipgram_loss_pallas.1} parent=5 // pred_region
        %s115 = ssub.s32 %s21, 1
        %p116 = pneg %p42
        %p117 = pneg %p39
        %p118 = pneg %p63
        %p119 = pneg %p60
        %p120 = pneg %p84
        %p121 = pneg %p81
        %s122 = smul.u32 %s26, 8
        %p123 = scmp.eq.s32.totalorder %s26, 0
        // Predicated region
        $region29: #{skipgram_loss_pallas.1} parent=27 // pred_check
          %p124 = pneg %p123
        $region30: #{skipgram_loss_pallas.1} parent=27 // pred_check_branch
          %126 = sbr.rel (%p124) target = $region32
        $region31: #{skipgram_loss_pallas.1} parent=27 // pred_region
          %vm127 = vcmask 0
          %128 = vst.msk [vmem:[#allocation7] sm:$0x1] %vm127, 0.0
        $region32: #{skipgram_loss_pallas.1} parent=27 // pred_fallthru
          _
        loop: start=0, step=1, limit=8
        $region33: #{skipgram_loss_pallas.1} parent=27 // loop_pre_header
          _
        $region34: #{skipgram_loss_pallas.1} parent=27 // loop_header
          %s130 = sphi 0, %s134
          %p131 = scmp.ge.s32.totalorder %s130, 8
        $region35: #{skipgram_loss_pallas.1} parent=27 // loop_header_branch
          %133 = sbr.rel (%p131) target = $region39
        $region36: #{skipgram_loss_pallas.1} parent=27 // loop_body
          %s135 = sadd.s32 %s122, %s130
          %p136 = scmp.lt.s32.totalorder %s135, 18
          %s137 = scalar_select %p136, %s135, 18
          %s138 = sld [smem:[#allocation5 + %s137]]
          %s139 = scalar_lea.vmem %s2, %s138
          %v140 = vld [vmem:[%s139] sm:$0x1]
          %s141 = smul.u32 %s130, 10
          loop: start=0, step=1, limit=10
          $region40: #{skipgram_loss_pallas.1} parent=36 // loop_pre_header
            _
          $region41: #{skipgram_loss_pallas.1} parent=36 // loop_header
            %s143 = sphi 0, %s147
            %p144 = scmp.ge.s32.totalorder %s143, 10
          $region42: #{skipgram_loss_pallas.1} parent=36 // loop_header_branch
            %146 = sbr.rel (%p144) target = $region46
          $region43: #{skipgram_loss_pallas.1} parent=36 // loop_body
            %s148 = sadd.s32 %s141, %s143
            %s149 = smul.u32 %s137, 10
            %s150 = sadd.s32 %s149, %s143
            %s151 = sld [smem:[#allocation6 + %s150]]
            %p152 = scmp.lt.s32.totalorder %s143, 5
            %s153 = scalar_select %p152, 1.0, -1.0
            %s154 = scalar_lea.vmem %s3, %s151
            %v155 = vld [vmem:[%s154] sm:$0x1]
            %v156 = vstv %s153
            %v157 = vmul.f32 %v155, %v156
            %s158 = scalar_lea.vmem [#allocation3], %s148
            %vm159 = vcmask 253952
            %160 = vst.msk [vmem:[%s158] sm:$0x1] %vm159, %v157
            %s161 = scalar_lea.vmem [#allocation2], %s148
            %162 = vst.msk [vmem:[%s161] sm:$0x1] %vm159, %v140
          $region44: #{skipgram_loss_pallas.1} parent=36 // loop_footer
            %s147 = sadd.s32 1, %s143
          $region45: #{skipgram_loss_pallas.1} parent=36 // loop_footer_branch
            %142 = sbr.rel target = $region41
          $region46: #{skipgram_loss_pallas.1} parent=36 // loop_exit
            _
        $region37: #{skipgram_loss_pallas.1} parent=27 // loop_footer
          %s134 = sadd.s32 1, %s130
        $region38: #{skipgram_loss_pallas.1} parent=27 // loop_footer_branch
          %129 = sbr.rel target = $region34
        $region39: #{skipgram_loss_pallas.1} parent=27 // loop_exit
          _
        %v163 = vld [vmem:[#allocation2] sm:$0xff]
        %v164 = vld [vmem:[#allocation2 + $0x8] sm:$0xff]
        %v165 = vld [vmem:[#allocation2 + $0x10] sm:$0xff]
        %v166 = vld [vmem:[#allocation2 + $0x18] sm:$0xff]
        %v167 = vld [vmem:[#allocation2 + $0x20] sm:$0xff]
        %v168 = vld [vmem:[#allocation2 + $0x28] sm:$0xff]
        %v169 = vld [vmem:[#allocation2 + $0x30] sm:$0xff]
        %v170 = vld [vmem:[#allocation2 + $0x38] sm:$0xff]
        %v171 = vld [vmem:[#allocation2 + $0x40] sm:$0xff]
        %v172 = vld [vmem:[#allocation2 + $0x48] sm:$0xff]
        %v173 = vld [vmem:[#allocation3] sm:$0xff]
        %v174 = vld [vmem:[#allocation3 + $0x8] sm:$0xff]
        %v175 = vld [vmem:[#allocation3 + $0x10] sm:$0xff]
        %v176 = vld [vmem:[#allocation3 + $0x18] sm:$0xff]
        %v177 = vld [vmem:[#allocation3 + $0x20] sm:$0xff]
        %v178 = vld [vmem:[#allocation3 + $0x28] sm:$0xff]
        %v179 = vld [vmem:[#allocation3 + $0x30] sm:$0xff]
        %v180 = vld [vmem:[#allocation3 + $0x38] sm:$0xff]
        %v181 = vld [vmem:[#allocation3 + $0x40] sm:$0xff]
        %v182 = vld [vmem:[#allocation3 + $0x48] sm:$0xff]
        %v183 = vmul.f32 %v163, %v173
        %v184 = vmul.f32 %v164, %v174
        %v185 = vmul.f32 %v165, %v175
        %v186 = vmul.f32 %v166, %v176
        %v187 = vmul.f32 %v167, %v177
        %v188 = vmul.f32 %v168, %v178
        %v189 = vmul.f32 %v169, %v179
        %v190 = vmul.f32 %v170, %v180
        %v191 = vmul.f32 %v171, %v181
        %v192 = vmul.f32 %v172, %v182
        %vm193 = vcmask 261120
        %v194 = vsel %vm193, %v183, 0.0
        %195 = vadd.xlane.f32.xlu0 %v194
        %v196 = vpop.xlane.xlu0 %195
        %v197 = vsel %vm193, %v184, 0.0
        %198 = vadd.xlane.f32.xlu0 %v197
        %v199 = vpop.xlane.xlu0 %198
        %v200 = vsel %vm193, %v185, 0.0
        %201 = vadd.xlane.f32.xlu0 %v200
        %v202 = vpop.xlane.xlu0 %201
        %v203 = vsel %vm193, %v186, 0.0
        %204 = vadd.xlane.f32.xlu0 %v203
        %v205 = vpop.xlane.xlu0 %204
        %v206 = vsel %vm193, %v187, 0.0
        %207 = vadd.xlane.f32.xlu0 %v206
        %v208 = vpop.xlane.xlu0 %207
        %v209 = vsel %vm193, %v188, 0.0
        %210 = vadd.xlane.f32.xlu0 %v209
        %v211 = vpop.xlane.xlu0 %210
        %v212 = vsel %vm193, %v189, 0.0
        %213 = vadd.xlane.f32.xlu0 %v212
        %v214 = vpop.xlane.xlu0 %213
        %v215 = vsel %vm193, %v190, 0.0
        %216 = vadd.xlane.f32.xlu0 %v215
        %v217 = vpop.xlane.xlu0 %216
        %v218 = vsel %vm193, %v191, 0.0
        %219 = vadd.xlane.f32.xlu0 %v218
        %v220 = vpop.xlane.xlu0 %219
        %v221 = vsel %vm193, %v192, 0.0
        %222 = vadd.xlane.f32.xlu0 %v221
        %v223 = vpop.xlane.xlu0 %222
        %v224 = vmin.f32 %v196, 0.0
        %v225 = vmin.f32 %v199, 0.0
        %v226 = vmin.f32 %v202, 0.0
        %v227 = vmin.f32 %v205, 0.0
        %v228 = vmin.f32 %v208, 0.0
        %v229 = vmin.f32 %v211, 0.0
        %v230 = vmin.f32 %v214, 0.0
        %v231 = vmin.f32 %v217, 0.0
        %v232 = vmin.f32 %v220, 0.0
        %v233 = vmin.f32 %v223, 0.0
        %v234 = vand.u32 2147483647, %v196
        %v235 = vand.u32 2147483647, %v199
        %v236 = vand.u32 2147483647, %v202
        %v237 = vand.u32 2147483647, %v205
        %v238 = vand.u32 2147483647, %v208
        %v239 = vand.u32 2147483647, %v211
        %v240 = vand.u32 2147483647, %v214
        %v241 = vand.u32 2147483647, %v217
        %v242 = vand.u32 2147483647, %v220
        %v243 = vand.u32 2147483647, %v223
        %v244 = vsub.f32 0.0, %v234
        %v245 = vsub.f32 0.0, %v235
        %v246 = vsub.f32 0.0, %v236
        %v247 = vsub.f32 0.0, %v237
        %v248 = vsub.f32 0.0, %v238
        %v249 = vsub.f32 0.0, %v239
        %v250 = vsub.f32 0.0, %v240
        %v251 = vsub.f32 0.0, %v241
        %v252 = vsub.f32 0.0, %v242
        %v253 = vsub.f32 0.0, %v243
        %v254 = vmul.f32 %v244, 1.442695
        %v255 = vpow.pop %v254
        %v256 = vmul.f32 %v245, 1.442695
        %v257 = vpow.pop %v256
        %v258 = vmul.f32 %v246, 1.442695
        %v259 = vpow.pop %v258
        %v260 = vmul.f32 %v247, 1.442695
        %v261 = vpow.pop %v260
        %v262 = vmul.f32 %v248, 1.442695
        %v263 = vpow.pop %v262
        %v264 = vmul.f32 %v249, 1.442695
        %v265 = vpow.pop %v264
        %v266 = vmul.f32 %v250, 1.442695
        %v267 = vpow.pop %v266
        %v268 = vmul.f32 %v251, 1.442695
        %v269 = vpow.pop %v268
        %v270 = vmul.f32 %v252, 1.442695
        %v271 = vpow.pop %v270
        %v272 = vmul.f32 %v253, 1.442695
        %v273 = vpow.pop %v272
        %v274 = vadd.f32 %v255, 1.0
        %v275 = vlog2.pop %v274
        %v276 = vmul.f32 %v275, 0.6931472
        %v277 = vmul.f32 -0.5, %v255
        %v278 = vadd.f32 %v277, 1.0
        %v279 = vmul.f32 %v278, %v255
        %v280 = vand.u32 2147483647, %v255
        %vm281 = vcmp.lt.f32.partialorder %v280, 0.0004427343
        %v282 = vsel %vm281, %v279, %v276
        %v283 = vadd.f32 %v257, 1.0
        %v284 = vlog2.pop %v283
        %v285 = vmul.f32 %v284, 0.6931472
        %v286 = vmul.f32 -0.5, %v257
        %v287 = vadd.f32 %v286, 1.0
        %v288 = vmul.f32 %v287, %v257
        %v289 = vand.u32 2147483647, %v257
        %vm290 = vcmp.lt.f32.partialorder %v289, 0.0004427343
        %v291 = vsel %vm290, %v288, %v285
        %v292 = vadd.f32 %v259, 1.0
        %v293 = vlog2.pop %v292
        %v294 = vmul.f32 %v293, 0.6931472
        %v295 = vmul.f32 -0.5, %v259
        %v296 = vadd.f32 %v295, 1.0
        %v297 = vmul.f32 %v296, %v259
        %v298 = vand.u32 2147483647, %v259
        %vm299 = vcmp.lt.f32.partialorder %v298, 0.0004427343
        %v300 = vsel %vm299, %v297, %v294
        %v301 = vadd.f32 %v261, 1.0
        %v302 = vlog2.pop %v301
        %v303 = vmul.f32 %v302, 0.6931472
        %v304 = vmul.f32 -0.5, %v261
        %v305 = vadd.f32 %v304, 1.0
        %v306 = vmul.f32 %v305, %v261
        %v307 = vand.u32 2147483647, %v261
        %vm308 = vcmp.lt.f32.partialorder %v307, 0.0004427343
        %v309 = vsel %vm308, %v306, %v303
        %v310 = vadd.f32 %v263, 1.0
        %v311 = vlog2.pop %v310
        %v312 = vmul.f32 %v311, 0.6931472
        %v313 = vmul.f32 -0.5, %v263
        %v314 = vadd.f32 %v313, 1.0
        %v315 = vmul.f32 %v314, %v263
        %v316 = vand.u32 2147483647, %v263
        %vm317 = vcmp.lt.f32.partialorder %v316, 0.0004427343
        %v318 = vsel %vm317, %v315, %v312
        %v319 = vadd.f32 %v265, 1.0
        %v320 = vlog2.pop %v319
        %v321 = vmul.f32 %v320, 0.6931472
        %v322 = vmul.f32 -0.5, %v265
        %v323 = vadd.f32 %v322, 1.0
        %v324 = vmul.f32 %v323, %v265
        %v325 = vand.u32 2147483647, %v265
        %vm326 = vcmp.lt.f32.partialorder %v325, 0.0004427343
        %v327 = vsel %vm326, %v324, %v321
        %v328 = vadd.f32 %v267, 1.0
        %v329 = vlog2.pop %v328
        %v330 = vmul.f32 %v329, 0.6931472
        %v331 = vmul.f32 -0.5, %v267
        %v332 = vadd.f32 %v331, 1.0
        %v333 = vmul.f32 %v332, %v267
        %v334 = vand.u32 2147483647, %v267
        %vm335 = vcmp.lt.f32.partialorder %v334, 0.0004427343
        %v336 = vsel %vm335, %v333, %v330
        %v337 = vadd.f32 %v269, 1.0
        %v338 = vlog2.pop %v337
        %v339 = vmul.f32 %v338, 0.6931472
        %v340 = vmul.f32 -0.5, %v269
        %v341 = vadd.f32 %v340, 1.0
        %v342 = vmul.f32 %v341, %v269
        %v343 = vand.u32 2147483647, %v269
        %vm344 = vcmp.lt.f32.partialorder %v343, 0.0004427343
        %v345 = vsel %vm344, %v342, %v339
        %v346 = vadd.f32 %v271, 1.0
        %v347 = vlog2.pop %v346
        %v348 = vmul.f32 %v347, 0.6931472
        %v349 = vmul.f32 -0.5, %v271
        %v350 = vadd.f32 %v349, 1.0
        %v351 = vmul.f32 %v350, %v271
        %v352 = vand.u32 2147483647, %v271
        %vm353 = vcmp.lt.f32.partialorder %v352, 0.0004427343
        %v354 = vsel %vm353, %v351, %v348
        %v355 = vadd.f32 %v273, 1.0
        %v356 = vlog2.pop %v355
        %v357 = vmul.f32 %v356, 0.6931472
        %v358 = vmul.f32 -0.5, %v273
        %v359 = vadd.f32 %v358, 1.0
        %v360 = vmul.f32 %v359, %v273
        %v361 = vand.u32 2147483647, %v273
        %vm362 = vcmp.lt.f32.partialorder %v361, 0.0004427343
        %v363 = vsel %vm362, %v360, %v357
        %v364 = vsub.f32 %v224, %v282
        %v365 = vsub.f32 %v225, %v291
        %v366 = vsub.f32 %v226, %v300
        %v367 = vsub.f32 %v227, %v309
        %v368 = vsub.f32 %v228, %v318
        %v369 = vsub.f32 %v229, %v327
        %v370 = vsub.f32 %v230, %v336
        %v371 = vsub.f32 %v231, %v345
        %v372 = vsub.f32 %v232, %v354
        %v373 = vsub.f32 %v233, %v363
        %v374 = vlaneseq
        %v375 = vshrl.u32 %v374, 7
        %v376 = vadd.s32 %v375, 8
        %v377 = vadd.s32 %v375, 16
        %v378 = vadd.s32 %v375, 24
        %v379 = vadd.s32 %v375, 32
        %v380 = vadd.s32 %v375, 40
        %v381 = vadd.s32 %v375, 48
        %v382 = vadd.s32 %v375, 56
        %v383 = vadd.s32 %v375, 64
        %v384 = vadd.s32 %v375, 72
        %s385 = ssub.s32 19, %s122
        %p386 = scmp.gt.s32.totalorder %s385, 0
        %s387 = scalar_select %p386, %s385, 0
        %p388 = scmp.lt.s32.totalorder %s387, 8
        %s389 = scalar_select %p388, %s387, 8
        %s390 = smul.u32 %s389, 10
        %v391 = vstv %s390
        %vm392 = vcmp.lt.s32.totalorder %v375, %v391
        %vm393 = vcmp.lt.s32.totalorder %v376, %v391
        %vm394 = vcmp.lt.s32.totalorder %v377, %v391
        %vm395 = vcmp.lt.s32.totalorder %v378, %v391
        %vm396 = vcmp.lt.s32.totalorder %v379, %v391
        %vm397 = vcmp.lt.s32.totalorder %v380, %v391
        %vm398 = vcmp.lt.s32.totalorder %v381, %v391
        %vm399 = vcmp.lt.s32.totalorder %v382, %v391
        %vm400 = vcmp.lt.s32.totalorder %v383, %v391
        %vm401 = vcmp.lt.s32.totalorder %v384, %v391
        %v402 = vsel %vm392, 1, 0
        %v403 = vsel %vm393, 1, 0
        %v404 = vsel %vm394, 1, 0
        %v405 = vsel %vm395, 1, 0
        %v406 = vsel %vm396, 1, 0
        %v407 = vsel %vm397, 1, 0
        %v408 = vsel %vm398, 1, 0
        %v409 = vsel %vm399, 1, 0
        %v410 = vsel %vm400, 1, 0
        %v411 = vsel %vm401, 1, 0
        %v412 = vcvt.s32.f32 %v402
        %v413 = vcvt.s32.f32 %v403
        %v414 = vcvt.s32.f32 %v404
        %v415 = vcvt.s32.f32 %v405
        %v416 = vcvt.s32.f32 %v406
        %v417 = vcvt.s32.f32 %v407
        %v418 = vcvt.s32.f32 %v408
        %v419 = vcvt.s32.f32 %v409
        %v420 = vcvt.s32.f32 %v410
        %v421 = vcvt.s32.f32 %v411
        %v422 = vld [vmem:[#allocation7] sm:$0x1]
        %v423 = vmul.f32 %v364, %v412
        %v424 = vmul.f32 %v365, %v413
        %v425 = vmul.f32 %v366, %v414
        %v426 = vmul.f32 %v367, %v415
        %v427 = vmul.f32 %v368, %v416
        %v428 = vmul.f32 %v369, %v417
        %v429 = vmul.f32 %v370, %v418
        %v430 = vmul.f32 %v371, %v419
        %v431 = vmul.f32 %v372, %v420
        %v432 = vmul.f32 %v373, %v421
        %vm433 = vcmask 7168
        %v434 = vsel %vm433, %v423, 0.0
        %v435 = vsel %vm433, %v424, 0.0
        %v436 = vadd.f32 %v434, %v435
        %v437 = vsel %vm433, %v425, 0.0
        %v438 = vadd.f32 %v436, %v437
        %v439 = vsel %vm433, %v426, 0.0
        %v440 = vadd.f32 %v438, %v439
        %v441 = vsel %vm433, %v427, 0.0
        %v442 = vadd.f32 %v440, %v441
        %v443 = vsel %vm433, %v428, 0.0
        %v444 = vadd.f32 %v442, %v443
        %v445 = vsel %vm433, %v429, 0.0
        %v446 = vadd.f32 %v444, %v445
        %v447 = vsel %vm433, %v430, 0.0
        %v448 = vadd.f32 %v446, %v447
        %v449 = vsel %vm433, %v431, 0.0
        %v450 = vadd.f32 %v448, %v449
        %v451 = vsel %vm433, %v432, 0.0
        %v452 = vadd.f32 %v450, %v451
        %453 = vadd.xlane.f32.xlu0 %v452
        %v454 = vpop.xlane.xlu0 %453
        %v455 = vrot.slane %v454, 4
        %v456 = vadd.f32 %v454, %v455
        %v457 = vrot.slane %v456, 2
        %v458 = vadd.f32 %v456, %v457
        %v459 = vrot.slane %v458, 1
        %v460 = vadd.f32 %v458, %v459
        %s461 = vtos %v460
        %v462 = vstv %s461
        %v463 = vadd.f32 %v422, %v462
        %vm464 = vcmask 0
        %465 = vst.msk [vmem:[#allocation7] sm:$0x1] %vm464, %v463
        %p466 = scmp.eq.s32.totalorder %s26, 2
        // Predicated region
        $region47: #{skipgram_loss_pallas.1} parent=27 // pred_check
          %p467 = pneg %p466
        $region48: #{skipgram_loss_pallas.1} parent=27 // pred_check_branch
          %469 = sbr.rel (%p467) target = $region50
        $region49: #{skipgram_loss_pallas.1} parent=27 // pred_region
          %v470 = vld [vmem:[#allocation7] sm:$0x1]
          %v471 = vmul.f32 %v470, -0.05263158
          %472 = vst.msk [vmem:[#allocation7] sm:$0x1] %vm464, %v471
        $region50: #{skipgram_loss_pallas.1} parent=27 // pred_fallthru
          _
        // Predicated region
        $region51: #{skipgram_loss_pallas.1} parent=27 // pred_check
          %p473 = pneg %p81
        $region52: #{skipgram_loss_pallas.1} parent=27 // pred_check_branch
          %475 = sbr.rel (%p473) target = $region54
        $region53: #{skipgram_loss_pallas.1} parent=27 // pred_region
          %s477 = ssub.s32 16, 16
          %478 = vsyncadd [#allocation8], %s477
          %s480 = sshll.u32 [#allocation7], 4
          %s481 = int_to_ptr.vmem [resolvable:$true] %s480
          %483 = dma.vmem_to_hbm [thread:$0]  %s481, 16, %s4, [#allocation8]
        $region54: #{skipgram_loss_pallas.1} parent=27 // pred_fallthru
          _
        // Predicated region
        $region55: #{skipgram_loss_pallas.1} parent=27 // pred_check
          %p484 = pneg %p81
        $region56: #{skipgram_loss_pallas.1} parent=27 // pred_check_branch
          %486 = sbr.rel (%p484) target = $region58
        $region57: #{skipgram_loss_pallas.1} parent=27 // pred_region
          %487 = dma.done [#allocation8], 16
        $region58: #{skipgram_loss_pallas.1} parent=27 // pred_fallthru
          _
      $region28: #{skipgram_loss_pallas.1} parent=5 // pred_fallthru
        _
      %p488 = scmp.le.s32.totalorder 2, %s21
      // Predicated region
      $region59: #{skipgram_loss_pallas.1} parent=5 // pred_check
        %p489 = pneg %p488
      $region60: #{skipgram_loss_pallas.1} parent=5 // pred_check_branch
        %491 = sbr.rel (%p489) target = $region62
      $region61: #{skipgram_loss_pallas.1} parent=5 // pred_region
        %s492 = ssub.s32 %s21, 2
      $region62: #{skipgram_loss_pallas.1} parent=5 // pred_fallthru
        _
    $region6: #{skipgram_loss_pallas.1} parent=1 // loop_footer
      %s25 = sadd.s32 1, %s21
    $region7: #{skipgram_loss_pallas.1} parent=1 // loop_footer_branch
      %20 = sbr.rel target = $region3
    $region8: #{skipgram_loss_pallas.1} parent=1 // loop_exit
      _
    %493 = vsyncpa [#allocation8], 1
    %s494 = scalar_lea.sflag [#allocation8], 1
    %495 = vsyncpa %s494, 1

</llo_original>
